<compile_context>
chip_gen: v7x
topology: tpu7x:2x2x1
jax: 0.10.0
libtpu: 0.0.40
codegen_flags: <defaults>
</compile_context>

<pallas_src>
import jax
import jax.numpy as jnp
from jax.experimental import pallas as pl
from jax.experimental.pallas import tpu as pltpu


def _gate_kernel(x_ref, w_ref, o_ref):
    """One token tile of the router GEMM.

    x_ref: [tm, H]  token tile of hidden_states (streamed, double-buffered)
    w_ref: [H, E]   full pre-transposed gate weight (VMEM-resident)
    o_ref: [tm, E]  output logits tile (f32)
    """
    o_ref[...] = jnp.dot(
        x_ref[...], w_ref[...], preferred_element_type=jnp.float32
    ).astype(o_ref.dtype)


def glm4_moe_gate(
    hidden_states: jax.Array,
    weight: jax.Array,
    *,
    tm: int = 512,
    out_dtype=jnp.float32,
) -> jax.Array:
    """Pallas implementation of Glm4MoeGate.forward (router GEMM).

    logits = hidden_states @ weight.T, accumulated in f32 on the MXU and
    emitted as float32 logits. For best throughput pass bf16 activations /
    weight (halves the HBM bytes of the dominant hidden_states stream).
    """
    T, H = hidden_states.shape
    E, H2 = weight.shape
    assert H == H2, "hidden_size mismatch"

    x = hidden_states
    # One-time transpose to the MXU-native [K, N] orientation. In production
    # this should be folded into weight loading; here it is a tiny XLA op.
    w_t = weight.T  # [H, E]

    # Row alignment: 8 is the minimal legal sublane multiple for blocks; round
    # large requested tiles to 16 for bf16 packing efficiency.
    pack_align = 16 if x.dtype == jnp.bfloat16 else 8
    tm = max(pack_align, ((int(tm) + pack_align - 1) // pack_align) * pack_align)
    t_aligned = ((T + 7) // 8) * 8
    tile_m = min(tm, t_aligned)

    # VMEM budget (conservative: 2 x-buffers, 2 weight buffers, 2 out buffers
    # even though the weight is requested single-buffered); shrink the token
    # tile until it fits a cap that is safe on v7x (64 MiB per-TC VMEM) as
    # well as v5e / v6e.
    x_bytes = jnp.dtype(x.dtype).itemsize
    w_bytes = jnp.dtype(w_t.dtype).itemsize
    o_bytes = jnp.dtype(out_dtype).itemsize

    def vmem_bytes(t):
        return 2 * t * H * x_bytes + 2 * H * E * w_bytes + 2 * t * E * o_bytes

    VMEM_CAP = 56 << 20
    while tile_m > 8 and vmem_bytes(tile_m) > VMEM_CAP:
        tile_m = max(8, ((tile_m // 2 + 7) // 8) * 8)

    # No wrapper-side padding: the grid covers ceil(T / tile_m) tiles; only the
    # M axis is ragged (H is contracted in full per step) and OOB output rows
    # are discarded by Pallas.
    grid = (pl.cdiv(T, tile_m),)

    # Explicit scoped-VMEM limit: above v5e's 16 MiB default, never above
    # v7x's 64 MiB per-TC physical VMEM.
    vmem_limit = int(min(max(vmem_bytes(tile_m) + (8 << 20), 32 << 20), 64 << 20))

    cost = pl.CostEstimate(
        flops=2 * T * H * E,
        transcendentals=0,
        bytes_accessed=(
            T * H * x_bytes        # hidden_states (dominant stream)
            + H * E * w_bytes      # gate weight (read once)
            + T * E * o_bytes      # logits
        ),
    )

    return pl.pallas_call(
        _gate_kernel,
        out_shape=jax.ShapeDtypeStruct((T, E), out_dtype),
        grid_spec=pltpu.PrefetchScalarGridSpec(
            num_scalar_prefetch=0,
            grid=grid,
            in_specs=[
                # Token tile of hidden_states, streamed over the grid.
                pl.BlockSpec((tile_m, H), lambda i: (i, 0)),
                # Full weight, constant index_map -> DMA'd once, VMEM-resident;
                # single buffer is sufficient (no pipelining needed).
                pl.BlockSpec((H, E), lambda i: (0, 0),
                             pipeline_mode=pl.Buffered(1)),
            ],
            out_specs=pl.BlockSpec((tile_m, E), lambda i: (i, 0)),
        ),
        compiler_params=pltpu.CompilerParams(
            # Token tiles are independent -> megacore-shardable on v7x.
            dimension_semantics=("parallel",),
            vmem_limit_bytes=vmem_limit,
        ),
        cost_estimate=cost,
    )(x, w_t)


if __name__ == "__main__":
    # Small synthetic config consistent with the module's __init__:
    #   n_routed_experts = 128, hidden_size = 256, num_tokens = 8 (decode-like)
    num_tokens = 8
    hidden_size = 256
    n_routed_experts = 128

    key = jax.random.PRNGKey(0)
    k_x, k_w, k_b = jax.random.split(key, 3)

    # Production-like bf16 activations / gate weight (half the HBM bytes of
    # f32 on the dominant hidden_states stream); logits come out in f32.
    hidden_states = jax.random.normal(
        k_x, (num_tokens, hidden_size), dtype=jnp.float32
    ).astype(jnp.bfloat16)
    weight = (
        jax.random.normal(k_w, (n_routed_experts, hidden_size), dtype=jnp.float32)
        * 0.02
    ).astype(jnp.bfloat16)
    # Present in __init__ but unused in forward; kept for parity.
    e_score_correction_bias = jax.random.normal(
        k_b, (n_routed_experts,), dtype=jnp.float32
    )

    logits = glm4_moe_gate(hidden_states, weight)
    logits = jax.block_until_ready(logits)

    ref = jnp.dot(hidden_states, weight.T, preferred_element_type=jnp.float32)
    assert logits.shape == (num_tokens, n_routed_experts)
    assert logits.dtype == jnp.float32
    assert jnp.allclose(logits, ref, atol=2e-2, rtol=2e-2)

    # Exercise the un-padded ragged path: multi-step grid with a partial last
    # token tile (T = 40, tile_m = 16 -> grid of 3 with 8 discarded rows).
    T2 = 40
    x2 = jax.random.normal(
        k_x, (T2, hidden_size), dtype=jnp.float32
    ).astype(jnp.bfloat16)
    logits2 = jax.block_until_ready(glm4_moe_gate(x2, weight, tm=16))
    ref2 = jnp.dot(x2, weight.T, preferred_element_type=jnp.float32)
    assert logits2.shape == (T2, n_routed_experts)
    assert jnp.allclose(logits2, ref2, atol=2e-2, rtol=2e-2)

    print("KERNEL_OK")
</pallas_src>

<mosaic_0001>
module attributes {stable_mosaic.version = 11 : i64} {
  func.func @_gate_kernel(%arg0: i32, %arg1: memref<8x256xbf16, #tpu.memory_space<vmem>>, %arg2: memref<256x128xbf16, #tpu.memory_space<vmem>>, %arg3: memref<8x128xf32, #tpu.memory_space<vmem>>) attributes {dimension_semantics = [#tpu.dimension_semantics<parallel>], iteration_bounds = array<i64: 1>, scalar_prefetch = 0 : i64, scratch_operands = 0 : i64, tpu.core_type = #tpu.core_type<tc>, window_params = [{transform_indices = @transform_0, window_bounds = array<i64: 8, 256>}, {pipeline_mode = #tpu.pipeline_mode<synchronous>, transform_indices = @transform_1, window_bounds = array<i64: 256, 128>}, {transform_indices = @transform_2, window_bounds = array<i64: 8, 128>}]} {
    %c0 = arith.constant 0 : index
    %c0_0 = arith.constant 0 : index
    %0 = vector.load %arg1[%c0, %c0_0] : memref<8x256xbf16, #tpu.memory_space<vmem>>, vector<8x256xbf16>
    %c0_1 = arith.constant 0 : index
    %c0_2 = arith.constant 0 : index
    %1 = vector.load %arg2[%c0_1, %c0_2] : memref<256x128xbf16, #tpu.memory_space<vmem>>, vector<256x128xbf16>
    %cst = arith.constant dense<0.000000e+00> : vector<8x128xf32>
    %2 = tpu.matmul %0, %1, %cst {dimension_numbers = #tpu.dot_dimension_numbers<[1], [0], [0], [1], [0, 0, 1, 1], [], []>} : vector<8x256xbf16>, vector<256x128xbf16>, vector<8x128xf32> -> vector<8x128xf32>
    %c0_3 = arith.constant 0 : index
    %c0_4 = arith.constant 0 : index
    %3 = vector.load %arg3[%c0_3, %c0_4] : memref<8x128xf32, #tpu.memory_space<vmem>>, vector<8x128xf32>
    tpu.vector_store %arg3[%c0_3, %c0_4], %2 {strides = array<i32>} : memref<8x128xf32, #tpu.memory_space<vmem>>, vector<8x128xf32>,
    return
  }
  func.func @transform_0(%arg0: i32) -> (i32, i32) {
    %c0_i32 = arith.constant 0 : i32
    %c0_i32_0 = arith.constant 0 : i32
    return %arg0, %c0_i32 : i32, i32
  }
  func.func @transform_1(%arg0: i32) -> (i32, i32) {
    %c0_i32 = arith.constant 0 : i32
    %c0_i32_0 = arith.constant 0 : i32
    %c0_i32_1 = arith.constant 0 : i32
    return %c0_i32, %c0_i32_0 : i32, i32
  }
  func.func @transform_2(%arg0: i32) -> (i32, i32) {
    %c0_i32 = arith.constant 0 : i32
    %c0_i32_0 = arith.constant 0 : i32
    return %arg0, %c0_i32 : i32, i32
  }
}

</mosaic_0001>

<llo_original>
// kernel: tpu_custom_call.1
$region0: #{tpu_custom_call.1}
  #allocation0 [shape = 'u32[]', space=smem, size = 0x4, offset = 0x4, fixed_abs, tag = 'smem constant byte address 0x4 - core index']
  #allocation1 [shape = 'u32[144,128]{1,0:T(1,128)}', space=vmem, size = 0x12000, scoped, tag = 'internal scratch']
  %s0 = inlined_call_operand.hbm [shape: bf16[8,256], index: 0, kind: input, shape index: {}]
  %s1 = inlined_call_operand.hbm [shape: bf16[256,128], index: 1, kind: input, shape index: {}]
  %s2 = inlined_call_operand.hbm [shape: f32[8,128], index: 2, kind: output, shape index: {}]
  %s3 = sld [smem:[#allocation0]]
  $region26: #{tpu_custom_call.1} parent=0
    _
  %s5 = ssub.s32 1, %s3
  %s6 = scalar_select 0, %s5, %s3
  $region1: #{tpu_custom_call.1} parent=0
    #allocation2 [shape = 'u8[4096]{0}', space=vmem, size = 0x1000, scoped, tag = 'input window, operand 0, single buffered']
    #allocation3 [shape = 's32[1]{0}', space=sflag, size = 0x4, scoped, tag = 'scoped memory for tpu_custom_call.1']
    #allocation4 [shape = 's32[1]{0}', space=sflag, size = 0x4, scoped, tag = 'scoped memory for tpu_custom_call.1']
    #allocation5 [shape = 'u8[65536]{0}', space=vmem, size = 0x10000, scoped, tag = 'input window, operand 1, single buffered']
    #allocation6 [shape = 's32[1]{0}', space=sflag, size = 0x4, scoped, tag = 'scoped memory for tpu_custom_call.1']
    #allocation7 [shape = 'u8[4096]{0}', space=vmem, size = 0x1000, scoped, tag = 'output window, operand 0, single buffered']
    %7 = vsyncpa [#allocation3], 0
    %8 = vsyncpa [#allocation6], 0
    %9 = vsyncpa [#allocation4], 0
    // Predicated region
    $region2: #{tpu_custom_call.1} parent=1 // pred_check
      _
    $region3: #{tpu_custom_call.1} parent=1 // pred_check_branch
      %11 = sbr.rel (0) target = $region5
    $region4: #{tpu_custom_call.1} parent=1 // pred_region
      %s13 = ssub.s32 128, 128
      %14 = vsyncadd [#allocation3], %s13
      %s16 = sshll.u32 [#allocation2], 4
      %s17 = int_to_ptr.vmem [resolvable:$true] %s16
      %19 = dma.hbm_to_vmem [thread:$0]  %s0, 128, %s17, [#allocation3]
    $region5: #{tpu_custom_call.1} parent=1 // pred_fallthru
      _
    // Predicated region
    $region6: #{tpu_custom_call.1} parent=1 // pred_check
      _
    $region7: #{tpu_custom_call.1} parent=1 // pred_check_branch
      %21 = sbr.rel (0) target = $region9
    $region8: #{tpu_custom_call.1} parent=1 // pred_region
      %s23 = ssub.s32 2048, 2048
      %24 = vsyncadd [#allocation6], %s23
      %s25 = sshll.u32 [#allocation5], 4
      %s26 = int_to_ptr.vmem [resolvable:$true] %s25
      %31 = dma.hbm_to_vmem [thread:$0]  %s1, 2048, %s26, [#allocation6], 64, 64, 4
    $region9: #{tpu_custom_call.1} parent=1 // pred_fallthru
      _
    // Predicated region
    $region10: #{tpu_custom_call.1} parent=1 // pred_check
      _
    $region11: #{tpu_custom_call.1} parent=1 // pred_check_branch
      %33 = sbr.rel (0) target = $region13
    $region12: #{tpu_custom_call.1} parent=1 // pred_region
      %34 = dma.done [#allocation3], 128
    $region13: #{tpu_custom_call.1} parent=1 // pred_fallthru
      _
    // Predicated region
    $region14: #{tpu_custom_call.1} parent=1 // pred_check
      _
    $region15: #{tpu_custom_call.1} parent=1 // pred_check_branch
      %36 = sbr.rel (0) target = $region17
    $region16: #{tpu_custom_call.1} parent=1 // pred_region
      %37 = dma.done [#allocation6], 2048
    $region17: #{tpu_custom_call.1} parent=1 // pred_fallthru
      _
    %v39 = vld [vmem:[#allocation2] sm:$0xff]
    %v40 = vld [vmem:[#allocation5] sm:$0xf]
    %v41 = vld [vmem:[#allocation5 + $0x4] sm:$0xf]
    %v42 = vld [vmem:[#allocation5 + $0x8] sm:$0xf]
    %v43 = vld [vmem:[#allocation5 + $0xc] sm:$0xf]
    %v44 = vld [vmem:[#allocation5 + $0x10] sm:$0xf]
    %v45 = vld [vmem:[#allocation5 + $0x14] sm:$0xf]
    %v46 = vld [vmem:[#allocation5 + $0x18] sm:$0xf]
    %v47 = vld [vmem:[#allocation5 + $0x1c] sm:$0xf]
    %v48 = vld [vmem:[#allocation5 + $0x20] sm:$0xf]
    %v49 = vld [vmem:[#allocation5 + $0x24] sm:$0xf]
    %v50 = vld [vmem:[#allocation5 + $0x28] sm:$0xf]
    %v51 = vld [vmem:[#allocation5 + $0x2c] sm:$0xf]
    %v52 = vld [vmem:[#allocation5 + $0x30] sm:$0xf]
    %v53 = vld [vmem:[#allocation5 + $0x34] sm:$0xf]
    %v54 = vld [vmem:[#allocation5 + $0x38] sm:$0xf]
    %v55 = vld [vmem:[#allocation5 + $0x3c] sm:$0xf]
    %v56 = vld [vmem:[#allocation5 + $0x40] sm:$0xf]
    %v57 = vld [vmem:[#allocation5 + $0x44] sm:$0xf]
    %v58 = vld [vmem:[#allocation5 + $0x48] sm:$0xf]
    %v59 = vld [vmem:[#allocation5 + $0x4c] sm:$0xf]
    %v60 = vld [vmem:[#allocation5 + $0x50] sm:$0xf]
    %v61 = vld [vmem:[#allocation5 + $0x54] sm:$0xf]
    %v62 = vld [vmem:[#allocation5 + $0x58] sm:$0xf]
    %v63 = vld [vmem:[#allocation5 + $0x5c] sm:$0xf]
    %v64 = vld [vmem:[#allocation5 + $0x60] sm:$0xf]
    %v65 = vld [vmem:[#allocation5 + $0x64] sm:$0xf]
    %v66 = vld [vmem:[#allocation5 + $0x68] sm:$0xf]
    %v67 = vld [vmem:[#allocation5 + $0x6c] sm:$0xf]
    %v68 = vld [vmem:[#allocation5 + $0x70] sm:$0xf]
    %v69 = vld [vmem:[#allocation5 + $0x74] sm:$0xf]
    %v70 = vld [vmem:[#allocation5 + $0x78] sm:$0xf]
    %v71 = vld [vmem:[#allocation5 + $0x7c] sm:$0xf]
    %v73 = vunpack.c.l.b16 %v39
    %v74 = vunpack.c.h.b16 %v39
    %v75 = vpack.c.b16 %v73, %v73
    %v76 = vpack.c.b16 %v74, %v74
    %v111 = vunpack.c.l.b16 %v40
    %v112 = vunpack.c.l.b16 %v41
    %v113 = vunpack.c.l.b16 %v42
    %v114 = vunpack.c.l.b16 %v43
    %v115 = vunpack.c.l.b16 %v44
    %v116 = vunpack.c.l.b16 %v45
    %v117 = vunpack.c.l.b16 %v46
    %v118 = vunpack.c.l.b16 %v47
    %v119 = vunpack.c.l.b16 %v48
    %v120 = vunpack.c.l.b16 %v49
    %v121 = vunpack.c.l.b16 %v50
    %v122 = vunpack.c.l.b16 %v51
    %v123 = vunpack.c.l.b16 %v52
    %v124 = vunpack.c.l.b16 %v53
    %v125 = vunpack.c.l.b16 %v54
    %v126 = vunpack.c.l.b16 %v55
    %v127 = vunpack.c.l.b16 %v56
    %v128 = vunpack.c.l.b16 %v57
    %v129 = vunpack.c.l.b16 %v58
    %v130 = vunpack.c.l.b16 %v59
    %v131 = vunpack.c.l.b16 %v60
    %v132 = vunpack.c.l.b16 %v61
    %v133 = vunpack.c.l.b16 %v62
    %v134 = vunpack.c.l.b16 %v63
    %v135 = vunpack.c.l.b16 %v64
    %v136 = vunpack.c.l.b16 %v65
    %v137 = vunpack.c.l.b16 %v66
    %v138 = vunpack.c.l.b16 %v67
    %v139 = vunpack.c.l.b16 %v68
    %v140 = vunpack.c.l.b16 %v69
    %v141 = vunpack.c.l.b16 %v70
    %v142 = vunpack.c.l.b16 %v71
    %v143 = vpack.c.b16 %v112, %v111
    %v144 = vpack.c.b16 %v114, %v113
    %v145 = vpack.c.b16 %v116, %v115
    %v146 = vpack.c.b16 %v118, %v117
    %v147 = vpack.c.b16 %v120, %v119
    %v148 = vpack.c.b16 %v122, %v121
    %v149 = vpack.c.b16 %v124, %v123
    %v150 = vpack.c.b16 %v126, %v125
    %v151 = vpack.c.b16 %v128, %v127
    %v152 = vpack.c.b16 %v130, %v129
    %v153 = vpack.c.b16 %v132, %v131
    %v154 = vpack.c.b16 %v134, %v133
    %v155 = vpack.c.b16 %v136, %v135
    %v156 = vpack.c.b16 %v138, %v137
    %v157 = vpack.c.b16 %v140, %v139
    %v158 = vpack.c.b16 %v142, %v141
    %175 = vmatprep.subr.bf16.mxu0 0
    %176 = vmatpush1.bf16.msra.mxu0 %v143
    %177 = vmatprep.subr.bf16.mxu0 0
    %178 = vmatpush1.bf16.msra.mxu0 %v144
    %179 = vmatprep.subr.bf16.mxu0 0
    %180 = vmatpush1.bf16.msra.mxu0 %v145
    %181 = vmatprep.subr.bf16.mxu0 0
    %182 = vmatpush1.bf16.msra.mxu0 %v146
    %183 = vmatprep.subr.bf16.mxu0 0
    %184 = vmatpush1.bf16.msra.mxu0 %v147
    %185 = vmatprep.subr.bf16.mxu0 0
    %186 = vmatpush1.bf16.msra.mxu0 %v148
    %187 = vmatprep.subr.bf16.mxu0 0
    %188 = vmatpush1.bf16.msra.mxu0 %v149
    %189 = vmatprep.subr.bf16.mxu0 0
    %190 = vmatpush1.bf16.msra.mxu0 %v150
    %191 = vmatprep.subr.bf16.mxu0 0
    %192 = vmatpush1.bf16.msra.mxu0 %v151
    %193 = vmatprep.subr.bf16.mxu0 0
    %194 = vmatpush1.bf16.msra.mxu0 %v152
    %195 = vmatprep.subr.bf16.mxu0 0
    %196 = vmatpush1.bf16.msra.mxu0 %v153
    %197 = vmatprep.subr.bf16.mxu0 0
    %198 = vmatpush1.bf16.msra.mxu0 %v154
    %199 = vmatprep.subr.bf16.mxu0 0
    %200 = vmatpush1.bf16.msra.mxu0 %v155
    %201 = vmatprep.subr.bf16.mxu0 0
    %202 = vmatpush1.bf16.msra.mxu0 %v156
    %203 = vmatprep.subr.bf16.mxu0 0
    %204 = vmatpush1.bf16.msra.mxu0 %v157
    %205 = vmatprep.subr.bf16.mxu0 0
    %206 = vmatpush1.bf16.msra.mxu0 %v158
    %207 = vmatprep.mubr.bf16.mxu0 %v76
    %208 = vmatmul.mubr.bf16.gmra.mrb[0].mxu0 %v75
    %v209 = vpop.f32.mrb[0].mxu0
    %v210 = vadd.f32 0.0, %v209
    %v211 = vpop.f32.mrb[0].mxu0
    %v212 = vpop.f32.mrb[0].mxu0
    %v213 = vpop.f32.mrb[0].mxu0
    %214 = vdwg.mxu0
    %215 = vst [vmem:[#allocation7] sm:$0xff] %v210
    // Predicated region
    $region18: #{tpu_custom_call.1} parent=1 // pred_check
      _
    $region19: #{tpu_custom_call.1} parent=1 // pred_check_branch
      %217 = sbr.rel (0) target = $region21
    $region20: #{tpu_custom_call.1} parent=1 // pred_region
      %s219 = ssub.s32 128, 128
      %220 = vsyncadd [#allocation4], %s219
      %s222 = sshll.u32 [#allocation7], 4
      %s223 = int_to_ptr.vmem [resolvable:$true] %s222
      %225 = dma.vmem_to_hbm [thread:$0]  %s223, 128, %s2, [#allocation4]
    $region21: #{tpu_custom_call.1} parent=1 // pred_fallthru
      _
    // Predicated region
    $region22: #{tpu_custom_call.1} parent=1 // pred_check
      _
    $region23: #{tpu_custom_call.1} parent=1 // pred_check_branch
      %227 = sbr.rel (0) target = $region25
    $region24: #{tpu_custom_call.1} parent=1 // pred_region
      %228 = dma.done [#allocation4], 128
    $region25: #{tpu_custom_call.1} parent=1 // pred_fallthru
      _
    %229 = vsyncpa [#allocation3], 1
    %230 = vsyncpa [#allocation6], 1
    %231 = vsyncpa [#allocation4], 1

</llo_original>
